<compile_context>
chip_gen: v6e
topology: v6e:2x2x1
jax: 0.10.0
libtpu: 0.0.40
codegen_flags: <defaults>
</compile_context>

<pallas_src>
import functools

import jax
import jax.numpy as jnp
from jax.experimental import pallas as pl
from jax.experimental.pallas import tpu as pltpu


def _cdiv(a, b):
    return (a + b - 1) // b


def _round_up(a, b):
    return _cdiv(a, b) * b


# Above this per-(minimal 8-row)-tile size, switch to the spatially-tiled path.
_FUSED_MIN_TILE_BYTES_LIMIT = 4 * 1024 * 1024
# Target x-tile size for the fused path (per review: 4-6 MiB on v6e, keep
# <= ~6-8 MiB resident*4 for v7x's 64 MiB physical VMEM).
_FUSED_TILE_BYTES_TARGET = 4 * 1024 * 1024
# Target x-tile size for the spatially-tiled path.
_SPATIAL_TILE_BYTES_TARGET = 2 * 1024 * 1024


# ---------------------------------------------------------------------------
# Kernels
# ---------------------------------------------------------------------------
def _adain_fused_kernel(x_ref, g_ref, b_ref, o_ref, *, hw, eps):
    """One (tile_r, HW) block per step: stats + normalize fused (1R + 1W of x)."""
    x = x_ref[...].astype(jnp.float32)
    inv_n = jnp.float32(1.0 / hw)
    s = jnp.sum(x, axis=-1, keepdims=True)                 # lane (XLU) reduction
    ss = jnp.sum(x * x, axis=-1, keepdims=True)
    mean = s * inv_n
    # Biased variance; clamp tiny negative fp noise from E[x^2]-E[x]^2.
    var = jnp.maximum(ss * inv_n - mean * mean, 0.0)
    inv_std = jax.lax.rsqrt(var + jnp.float32(eps))        # EUP
    scale = inv_std * g_ref[...]                           # (tile_r, 1)
    shift = b_ref[...] - mean * scale
    o_ref[...] = (x * scale + shift).astype(o_ref.dtype)


def _adain_spatial_kernel(x_ref, g_ref, b_ref, o_ref,
                          sum_ref, ssq_ref, scale_ref, shift_ref,
                          *, hw, hw_tile, hw_tiles, eps):
    """Two-stage path for huge H*W: phase 1 accumulate stats, phase 2 write."""
    j = pl.program_id(1)

    @pl.when(j == 0)
    def _():
        sum_ref[...] = jnp.zeros_like(sum_ref)
        ssq_ref[...] = jnp.zeros_like(ssq_ref)

    x = x_ref[...].astype(jnp.float32)

    # Phase 1: accumulate per-row sum / sum-of-squares over spatial tiles.
    @pl.when(j < hw_tiles)
    def _():
        rem = hw % hw_tile
        if rem:   # only the trailing partial spatial tile needs a lane mask
            lane = jax.lax.broadcasted_iota(jnp.int32, x.shape, dimension=1)
            valid = jnp.logical_or(j != hw_tiles - 1, lane < rem)
            xm = jnp.where(valid, x, 0.0)
        else:
            xm = x
        sum_ref[...] += jnp.sum(xm, axis=-1, keepdims=True)
        ssq_ref[...] += jnp.sum(xm * xm, axis=-1, keepdims=True)

    # Finalize the per-row stats exactly once, at the first phase-2 step.
    @pl.when(j == hw_tiles)
    def _():
        inv_n = jnp.float32(1.0 / hw)
        mean = sum_ref[...] * inv_n
        var = jnp.maximum(ssq_ref[...] * inv_n - mean * mean, 0.0)
        inv_std = jax.lax.rsqrt(var + jnp.float32(eps))
        scale = inv_std * g_ref[...]
        scale_ref[...] = scale
        shift_ref[...] = b_ref[...] - mean * scale

    # Phase 2: re-read x tile-by-tile, normalize, write.
    @pl.when(j >= hw_tiles)
    def _():
        o_ref[...] = (x * scale_ref[...] + shift_ref[...]).astype(o_ref.dtype)


# ---------------------------------------------------------------------------
# Wrappers
# ---------------------------------------------------------------------------
def _adain_fused_call(x2, g2, b2, *, eps, itemsize):
    R, HW = x2.shape
    row_bytes = HW * itemsize

    # Row-tile sizing: dtype-aware byte budget, multiple of 8 sublanes, with a
    # cap that keeps >=2 (ideally >=4) grid steps when R allows it (v7x 2-TC
    # sharding + pipelining).
    if R <= 8:
        tile_r = R
    else:
        tile_r = max(8, (_FUSED_TILE_BYTES_TARGET // row_bytes) // 8 * 8)
        tile_r = min(tile_r, 1024)
        if R >= 32:
            tile_r = min(tile_r, _round_up(_cdiv(R, 4), 8))
        elif R >= 16:
            tile_r = min(tile_r, _round_up(_cdiv(R, 2), 8))
        if tile_r >= R:
            tile_r = R

    tile_bytes = tile_r * HW * itemsize
    f32_tile_bytes = tile_r * HW * 4
    # 2 buffers each for in/out + f32 temporaries + headroom; safe on v7x 64 MiB.
    vmem_limit = int(min(max(4 * tile_bytes + 3 * f32_tile_bytes + (2 << 20),
                             32 << 20), 56 << 20))

    kernel = functools.partial(_adain_fused_kernel, hw=HW, eps=eps)
    return pl.pallas_call(
        kernel,
        out_shape=jax.ShapeDtypeStruct((R, HW), x2.dtype),
        grid=(_cdiv(R, tile_r),),
        in_specs=[
            pl.BlockSpec((tile_r, HW), lambda i: (i, 0)),
            pl.BlockSpec((tile_r, 1), lambda i: (i, 0)),
            pl.BlockSpec((tile_r, 1), lambda i: (i, 0)),
        ],
        out_specs=pl.BlockSpec((tile_r, HW), lambda i: (i, 0)),
        compiler_params=pltpu.CompilerParams(
            dimension_semantics=("parallel",),
            vmem_limit_bytes=vmem_limit,
        ),
        cost_estimate=pl.CostEstimate(
            flops=6 * R * HW,
            transcendentals=R,
            bytes_accessed=2 * R * HW * itemsize + 8 * R,
        ),
    )(x2, g2, b2)


def _adain_spatial_call(x2, g2, b2, *, eps, itemsize, spatial_tile=None):
    R, HW = x2.shape
    tile_r = R if R < 8 else 8

    if spatial_tile is None:
        spatial_tile = max(128,
                           (_SPATIAL_TILE_BYTES_TARGET // (tile_r * itemsize))
                           // 128 * 128)
    hw_tile = max(128, (int(spatial_tile) // 128) * 128)
    hw_tile = min(hw_tile, _round_up(HW, 128))
    hw_tiles = _cdiv(HW, hw_tile)

    tile_bytes = tile_r * hw_tile * itemsize
    f32_tile_bytes = tile_r * hw_tile * 4
    vmem_limit = int(min(max(4 * tile_bytes + 3 * f32_tile_bytes + (2 << 20),
                             32 << 20), 56 << 20))

    kernel = functools.partial(_adain_spatial_kernel, hw=HW, hw_tile=hw_tile,
                               hw_tiles=hw_tiles, eps=eps)
    return pl.pallas_call(
        kernel,
        out_shape=jax.ShapeDtypeStruct((R, HW), x2.dtype),
        grid=(_cdiv(R, tile_r), 2 * hw_tiles),
        in_specs=[
            # Phase 1 reads spatial tile j, phase 2 re-reads tile j - hw_tiles.
            pl.BlockSpec((tile_r, hw_tile), lambda i, j: (i, j % hw_tiles)),
            pl.BlockSpec((tile_r, 1), lambda i, j: (i, 0)),
            pl.BlockSpec((tile_r, 1), lambda i, j: (i, 0)),
        ],
        out_specs=pl.BlockSpec(
            (tile_r, hw_tile), lambda i, j: (i, jnp.maximum(j - hw_tiles, 0))),
        scratch_shapes=[
            pltpu.VMEM((tile_r, 1), jnp.float32),   # sum
            pltpu.VMEM((tile_r, 1), jnp.float32),   # sum of squares
            pltpu.VMEM((tile_r, 1), jnp.float32),   # scale
            pltpu.VMEM((tile_r, 1), jnp.float32),   # shift
        ],
        compiler_params=pltpu.CompilerParams(
            dimension_semantics=("parallel", "arbitrary"),
            vmem_limit_bytes=vmem_limit,
        ),
        cost_estimate=pl.CostEstimate(
            flops=6 * R * HW,
            transcendentals=R,
            bytes_accessed=3 * R * HW * itemsize + 8 * R,
        ),
    )(x2, g2, b2)


def adaptive_instance_norm_2d(x, weight, bias, *, eps=1e-5, spatial_tile=None):
    """AdaIN forward: per-(b, c) instance norm over H*W + affine(weight, bias)."""
    B, C, H, W = x.shape
    R = B * C
    HW = H * W
    itemsize = x.dtype.itemsize

    # Free (contiguous) reshapes — no HBM copies in the wrapper.
    x2 = x.reshape(R, HW)
    g2 = jnp.asarray(weight, jnp.float32).reshape(R, 1)
    b2 = jnp.asarray(bias, jnp.float32).reshape(R, 1)

    min_tile_rows = R if R < 8 else 8
    use_spatial = (spatial_tile is not None or
                   HW * itemsize * min_tile_rows > _FUSED_MIN_TILE_BYTES_LIMIT)

    if use_spatial:
        out2 = _adain_spatial_call(x2, g2, b2, eps=eps, itemsize=itemsize,
                                   spatial_tile=spatial_tile)
    else:
        out2 = _adain_fused_call(x2, g2, b2, eps=eps, itemsize=itemsize)
    return out2.reshape(B, C, H, W)


class AdaptiveInstanceNorm2dPallas:
    """JAX/Pallas mirror of the PyTorch AdaptiveInstanceNorm2d module."""

    def __init__(self, num_features, eps=1e-5, momentum=0.1):
        self.num_features = num_features
        self.eps = eps
        self.momentum = momentum
        # Assigned externally (e.g. from a style MLP), shape (B*C,).
        self.weight = None
        self.bias = None
        # Buffers kept for fidelity; the reference updates `.repeat(b)` copies
        # inside batch_norm, so the updates never persist and the forward
        # output never depends on them.
        self.running_mean = jnp.zeros((num_features,), jnp.float32)
        self.running_var = jnp.ones((num_features,), jnp.float32)

    def forward(self, x):
        assert self.weight is not None and self.bias is not None, (
            "Please assign AdaIN weight first"
        )
        return adaptive_instance_norm_2d(x, self.weight, self.bias, eps=self.eps)

    def __repr__(self):
        return self.__class__.__name__ + "(" + str(self.num_features) + ")"


# ---------------------------------------------------------------------------
# Self-test
# ---------------------------------------------------------------------------
def _reference(x, weight, bias, eps):
    B, C, H, W = x.shape
    xf = x.astype(jnp.float32)
    mean = xf.mean(axis=(2, 3), keepdims=True)
    var = ((xf - mean) ** 2).mean(axis=(2, 3), keepdims=True)
    ref = (xf - mean) * jax.lax.rsqrt(var + eps)
    ref = ref * weight.reshape(B, C, 1, 1) + bias.reshape(B, C, 1, 1)
    return ref.astype(x.dtype)


if __name__ == "__main__":
    key = jax.random.PRNGKey(0)

    def run_case(B, C, H, W, spatial_tile=None, tag=""):
        ks = jax.random.fold_in(key, B * 10000 + C * 1000 + H * 10 + W)
        kx, kw, kb = jax.random.split(ks, 3)
        x = jax.random.normal(kx, (B, C, H, W), dtype=jnp.float32) * 2.0 + 0.5
        weight = jax.random.normal(kw, (B * C,), dtype=jnp.float32) * 0.5 + 1.0
        bias = jax.random.normal(kb, (B * C,), dtype=jnp.float32) * 0.1
        out = adaptive_instance_norm_2d(x, weight, bias, eps=1e-5,
                                        spatial_tile=spatial_tile)
        out = jax.block_until_ready(out)
        ref = _reference(x, weight, bias, 1e-5)
        assert out.shape == x.shape and out.dtype == x.dtype
        err = float(jnp.max(jnp.abs(out - ref)))
        assert bool(jnp.allclose(out, ref, rtol=1e-4, atol=1e-4)), (
            f"{tag} mismatch vs reference: max abs err = {err}")

    # 1) Module-style usage on the primary fused path (demo shape).
    B, C, H, W = 2, 4, 16, 16
    kx, kw, kb = jax.random.split(key, 3)
    x = jax.random.normal(kx, (B, C, H, W), dtype=jnp.float32)
    adain = AdaptiveInstanceNorm2dPallas(num_features=C)
    adain.weight = jax.random.normal(kw, (B * C,), dtype=jnp.float32) * 0.5 + 1.0
    adain.bias = jax.random.normal(kb, (B * C,), dtype=jnp.float32) * 0.1
    out = jax.block_until_ready(adain.forward(x))
    ref = _reference(x, adain.weight, adain.bias, adain.eps)
    assert out.shape == x.shape and out.dtype == x.dtype
    assert bool(jnp.allclose(out, ref, rtol=1e-4, atol=1e-4)), (
        "module mismatch vs reference: max abs err = "
        + str(float(jnp.max(jnp.abs(out - ref)))))

    # 2) Multi-step grid with a trailing partial row tile (R=18 -> tile_r=16).
    run_case(2, 9, 16, 16, tag="partial-row-tile")

    # 3) Spatially-tiled two-stage path (forced), incl. a non-128-multiple
    #    trailing spatial tile (H*W = 900, hw_tile = 256).
    run_case(1, 2, 30, 30, spatial_tile=256, tag="spatial-tiled")

    print("KERNEL_OK")
</pallas_src>

<mosaic_0001>
module attributes {stable_mosaic.version = 11 : i64} {
  func.func @_adain_fused_kernel(%arg0: i32, %arg1: memref<8x256xf32, #tpu.memory_space<vmem>>, %arg2: memref<8x1xf32, #tpu.memory_space<vmem>>, %arg3: memref<8x1xf32, #tpu.memory_space<vmem>>, %arg4: memref<8x256xf32, #tpu.memory_space<vmem>>) attributes {dimension_semantics = [#tpu.dimension_semantics<parallel>], iteration_bounds = array<i64: 1>, scalar_prefetch = 0 : i64, scratch_operands = 0 : i64, tpu.core_type = #tpu.core_type<tc>, window_params = [{transform_indices = @transform_0, window_bounds = array<i64: 8, 256>}, {transform_indices = @transform_1, window_bounds = array<i64: 8, 1>}, {transform_indices = @transform_2, window_bounds = array<i64: 8, 1>}, {transform_indices = @transform_3, window_bounds = array<i64: 8, 256>}]} {
    %c0 = arith.constant 0 : index
    %c0_0 = arith.constant 0 : index
    %0 = vector.load %arg1[%c0, %c0_0] : memref<8x256xf32, #tpu.memory_space<vmem>>, vector<8x256xf32>
    %cst = arith.constant dense<0.000000e+00> : vector<8xf32>
    %1 = vector.multi_reduction <add>, %0, %cst [1] : vector<8x256xf32> to vector<8xf32>
    %2 = vector.shape_cast %1 : vector<8xf32> to vector<8x1xf32>
    %3 = arith.mulf %0, %0 : vector<8x256xf32>
    %cst_1 = arith.constant dense<0.000000e+00> : vector<8xf32>
    %4 = vector.multi_reduction <add>, %3, %cst_1 [1] : vector<8x256xf32> to vector<8xf32>
    %5 = vector.shape_cast %4 : vector<8xf32> to vector<8x1xf32>
    %cst_2 = arith.constant 3.906250e-03 : f32
    %6 = vector.broadcast %cst_2 : f32 to vector<8x1xf32>
    %7 = arith.mulf %2, %6 : vector<8x1xf32>
    %cst_3 = arith.constant 3.906250e-03 : f32
    %8 = vector.broadcast %cst_3 : f32 to vector<8x1xf32>
    %9 = arith.mulf %5, %8 : vector<8x1xf32>
    %10 = arith.mulf %7, %7 : vector<8x1xf32>
    %11 = arith.subf %9, %10 : vector<8x1xf32>
    %cst_4 = arith.constant 0.000000e+00 : f32
    %12 = vector.broadcast %cst_4 : f32 to vector<8x1xf32>
    %13 = arith.maximumf %11, %12 : vector<8x1xf32>
    %cst_5 = arith.constant 9.99999974E-6 : f32
    %14 = vector.broadcast %cst_5 : f32 to vector<8x1xf32>
    %15 = arith.addf %13, %14 : vector<8x1xf32>
    %16 = math.rsqrt %15 : vector<8x1xf32>
    %c0_6 = arith.constant 0 : index
    %c0_7 = arith.constant 0 : index
    %17 = vector.load %arg2[%c0_6, %c0_7] : memref<8x1xf32, #tpu.memory_space<vmem>>, vector<8x1xf32>
    %18 = arith.mulf %16, %17 : vector<8x1xf32>
    %c0_8 = arith.constant 0 : index
    %c0_9 = arith.constant 0 : index
    %19 = vector.load %arg3[%c0_8, %c0_9] : memref<8x1xf32, #tpu.memory_space<vmem>>, vector<8x1xf32>
    %20 = arith.mulf %7, %18 : vector<8x1xf32>
    %21 = arith.subf %19, %20 : vector<8x1xf32>
    %22 = vector.broadcast %18 : vector<8x1xf32> to vector<8x256xf32>
    %23 = arith.mulf %0, %22 : vector<8x256xf32>
    %24 = vector.broadcast %21 : vector<8x1xf32> to vector<8x256xf32>
    %25 = arith.addf %23, %24 : vector<8x256xf32>
    %c0_10 = arith.constant 0 : index
    %c0_11 = arith.constant 0 : index
    %26 = vector.load %arg4[%c0_10, %c0_11] : memref<8x256xf32, #tpu.memory_space<vmem>>, vector<8x256xf32>
    tpu.vector_store %arg4[%c0_10, %c0_11], %25 {strides = array<i32>} : memref<8x256xf32, #tpu.memory_space<vmem>>, vector<8x256xf32>,
    return
  }
  func.func @transform_0(%arg0: i32) -> (i32, i32) {
    %c0_i32 = arith.constant 0 : i32
    %c0_i32_0 = arith.constant 0 : i32
    return %arg0, %c0_i32 : i32, i32
  }
  func.func @transform_1(%arg0: i32) -> (i32, i32) {
    %c0_i32 = arith.constant 0 : i32
    %c0_i32_0 = arith.constant 0 : i32
    return %arg0, %c0_i32 : i32, i32
  }
  func.func @transform_2(%arg0: i32) -> (i32, i32) {
    %c0_i32 = arith.constant 0 : i32
    %c0_i32_0 = arith.constant 0 : i32
    return %arg0, %c0_i32 : i32, i32
  }
  func.func @transform_3(%arg0: i32) -> (i32, i32) {
    %c0_i32 = arith.constant 0 : i32
    %c0_i32_0 = arith.constant 0 : i32
    return %arg0, %c0_i32 : i32, i32
  }
}

</mosaic_0001>

<llo_original>
// kernel: tpu_custom_call.1
$region0: #{tpu_custom_call.1}
  #allocation0 [shape = 'u32[]', space=smem, size = 0x4, offset = 0x4, fixed_abs, tag = 'smem constant byte address 0x4 - core index']
  #allocation1 [shape = 'u32[144,128]{1,0:T(1,128)}', space=vmem, size = 0x12000, scoped, tag = 'internal scratch']
  %s0 = inlined_call_operand.vmem [shape: f32[8,256], index: 0, kind: input, shape index: {}]
  %s1 = inlined_call_operand.vmem [shape: f32[8,1], index: 1, kind: input, shape index: {}]
  %s2 = inlined_call_operand.vmem [shape: f32[8,1], index: 2, kind: input, shape index: {}]
  %s3 = inlined_call_operand.hbm [shape: f32[8,256], index: 3, kind: output, shape index: {}]
  %s4 = sld [smem:[#allocation0]]
  $region22: #{tpu_custom_call.1} parent=0
    _
  %s6 = ssub.s32 1, %s4
  %s7 = scalar_select 0, %s6, %s4
  $region1: #{tpu_custom_call.1} parent=0
    #allocation2 [shape = 'u8[8192]{0}', space=vmem, size = 0x2000, scoped, tag = 'output window, operand 0, single buffered']
    #allocation3 [shape = 's32[1]{0}', space=sflag, size = 0x4, scoped, tag = 'scoped memory for tpu_custom_call.1']
    %8 = vsyncpa [#allocation3], 0
    // Predicated region
    $region2: #{tpu_custom_call.1} parent=1 // pred_check
      _
    $region3: #{tpu_custom_call.1} parent=1 // pred_check_branch
      %10 = sbr.rel (0) target = $region5
    $region4: #{tpu_custom_call.1} parent=1 // pred_region
      _
    $region5: #{tpu_custom_call.1} parent=1 // pred_fallthru
      _
    // Predicated region
    $region6: #{tpu_custom_call.1} parent=1 // pred_check
      _
    $region7: #{tpu_custom_call.1} parent=1 // pred_check_branch
      %12 = sbr.rel (0) target = $region9
    $region8: #{tpu_custom_call.1} parent=1 // pred_region
      _
    $region9: #{tpu_custom_call.1} parent=1 // pred_fallthru
      _
    // Predicated region
    $region10: #{tpu_custom_call.1} parent=1 // pred_check
      _
    $region11: #{tpu_custom_call.1} parent=1 // pred_check_branch
      %14 = sbr.rel (0) target = $region13
    $region12: #{tpu_custom_call.1} parent=1 // pred_region
      _
    $region13: #{tpu_custom_call.1} parent=1 // pred_fallthru
      _
    %v15 = vld [vmem:[%s0] sm:$0xff]
    %v16 = vld [vmem:[%s0 + $0x8] sm:$0xff]
    %v17 = vadd.f32 %v15, %v16
    %18 = vadd.xlane.f32.xlu0 %v17
    %v19 = vpop.xlane.xlu0 %18
    %v20 = vmul.f32 %v15, %v15
    %v21 = vmul.f32 %v16, %v16
    %v22 = vadd.f32 %v20, %v21
    %23 = vadd.xlane.f32.xlu0 %v22
    %v24 = vpop.xlane.xlu0 %23
    %v25 = vmul.f32 %v19, 0.00390625
    %v26 = vmul.f32 %v24, 0.00390625
    %v27 = vmul.f32 %v25, %v25
    %v28 = vsub.f32 %v26, %v27
    %v29 = vmax.f32 %v28, 0.0
    %v30 = vadd.f32 %v29, 1e-05
    %v31 = vrsqrt.pop %v30
    %v32 = vld [vmem:[%s1] sm:$0xff]
    %v33 = vmul.f32 %v31, %v32
    %v34 = vld [vmem:[%s2] sm:$0xff]
    %v35 = vmul.f32 %v25, %v33
    %v36 = vsub.f32 %v34, %v35
    %38 = vset.pattern.permute.xlu0 0
    %39 = vperm.xlu0 %38, %v33
    %v40 = vpop.permute.xlu0 %39
    %v42 = vmul.f32 %v15, %v40
    %v43 = vmul.f32 %v16, %v40
    %45 = vset.pattern.permute.xlu0 0
    %46 = vperm.xlu0 %45, %v36
    %v47 = vpop.permute.xlu0 %46
    %v49 = vadd.f32 %v42, %v47
    %v50 = vadd.f32 %v43, %v47
    %51 = vst [vmem:[#allocation2] sm:$0xff] %v49
    %52 = vst [vmem:[#allocation2 + $0x8] sm:$0xff] %v50
    // Predicated region
    $region14: #{tpu_custom_call.1} parent=1 // pred_check
      _
    $region15: #{tpu_custom_call.1} parent=1 // pred_check_branch
      %54 = sbr.rel (0) target = $region17
    $region16: #{tpu_custom_call.1} parent=1 // pred_region
      %s56 = ssub.s32 256, 256
      %57 = vsyncadd [#allocation3], %s56
      %s59 = sshll.u32 [#allocation2], 4
      %s60 = int_to_ptr.vmem [resolvable:$true] %s59
      %62 = dma.vmem_to_hbm [thread:$0]  %s60, 256, %s3, [#allocation3]
    $region17: #{tpu_custom_call.1} parent=1 // pred_fallthru
      _
    // Predicated region
    $region18: #{tpu_custom_call.1} parent=1 // pred_check
      _
    $region19: #{tpu_custom_call.1} parent=1 // pred_check_branch
      %64 = sbr.rel (0) target = $region21
    $region20: #{tpu_custom_call.1} parent=1 // pred_region
      %65 = dma.done [#allocation3], 256
    $region21: #{tpu_custom_call.1} parent=1 // pred_fallthru
      _
    %66 = vsyncpa [#allocation3], 1

</llo_original>
